<compile_context>
chip_gen: v7x
topology: tpu7x:2x2x1
jax: 0.10.0
libtpu: 0.0.40
codegen_flags: <defaults>
</compile_context>

<pallas_src>
import functools

import jax
import jax.numpy as jnp
from jax import lax
from jax.experimental import pallas as pl
from jax.experimental.pallas import tpu as pltpu


def _roi_pool_kernel(batch_ref, hbins_ref, wmask_ref, valid_ref, x_ref,
                     out_ref, band_ref, *, H, W, PH, PW):
    # batch_ref: SMEM int32 [K]            (scalar prefetch; drives the input index_map)
    # hbins_ref: SMEM int32 [K * 2*PH]     (flat: PH hstarts then PH hends per ROI)
    # wmask_ref: VMEM f32   (1, PW, W, 1)  precomputed column masks (0/1)
    # valid_ref: VMEM f32   (1, PH*PW, 1)  precomputed non-empty-bin flags (0/1)
    # x_ref:     VMEM f32   (1, H, W, C)   feature map of this ROI's image (NHWC)
    # out_ref:   VMEM f32   (1, PH*PW, C)
    # band_ref:  VMEM f32   (PH, W, C)     scratch: per-pooled-row row-band maxima
    k = pl.program_id(0)
    base = k * (2 * PH)
    neg_inf = jnp.float32(-jnp.inf)

    # ---- pass 1: per pooled row ph, masked max over image rows -> (W, C) band.
    row = lax.broadcasted_iota(jnp.int32, (H, W, 1), 0)
    for ph in range(PH):
        hs = hbins_ref[base + ph]
        he = hbins_ref[base + PH + ph]
        mask_h = (row >= hs) & (row < he)                # (H, W, 1)
        # load inside the loop (keeps vreg live ranges bounded)
        vals = jnp.where(mask_h, x_ref[0], neg_inf)      # (H, W, C)
        band_ref[ph] = jnp.max(vals, axis=0)             # (W, C)

    # ---- pass 2: per pooled row, all PW column bins at once -> one slab store.
    wm = wmask_ref[0]                                    # (PW, W, 1) in {0, 1}
    for ph in range(PH):
        band = band_ref[ph]                              # (W, C)
        vals = jnp.where(wm > 0.0, band[None, :, :], neg_inf)   # (PW, W, C)
        m = jnp.max(vals, axis=1)                        # (PW, C)
        vrow = valid_ref[0, pl.ds(ph * PW, PW), :]       # (PW, 1) in {0, 1}
        out_ref[0, pl.ds(ph * PW, PW), :] = jnp.where(vrow > 0.0, m, 0.0)


def _compute_bins(rois, spatial_scale, H, W, PH, PW):
    """ROI coords -> clamped integer bin boundaries (torchvision semantics)."""
    def rnd(v):  # C round(): half away from zero (correct for negative coords too)
        return (jnp.sign(v) * jnp.floor(jnp.abs(v) + 0.5)).astype(jnp.int32)

    roi_start_w = rnd(rois[:, 1] * spatial_scale)
    roi_start_h = rnd(rois[:, 2] * spatial_scale)
    roi_end_w = rnd(rois[:, 3] * spatial_scale)
    roi_end_h = rnd(rois[:, 4] * spatial_scale)
    roi_w = jnp.maximum(roi_end_w - roi_start_w + 1, 1)
    roi_h = jnp.maximum(roi_end_h - roi_start_h + 1, 1)
    bin_h = roi_h.astype(jnp.float32) / PH
    bin_w = roi_w.astype(jnp.float32) / PW

    ph = jnp.arange(PH, dtype=jnp.float32)
    pw = jnp.arange(PW, dtype=jnp.float32)
    hstart = jnp.floor(ph[None, :] * bin_h[:, None]).astype(jnp.int32) + roi_start_h[:, None]
    hend = jnp.ceil((ph[None, :] + 1.0) * bin_h[:, None]).astype(jnp.int32) + roi_start_h[:, None]
    wstart = jnp.floor(pw[None, :] * bin_w[:, None]).astype(jnp.int32) + roi_start_w[:, None]
    wend = jnp.ceil((pw[None, :] + 1.0) * bin_w[:, None]).astype(jnp.int32) + roi_start_w[:, None]
    hstart = jnp.clip(hstart, 0, H)
    hend = jnp.clip(hend, 0, H)
    wstart = jnp.clip(wstart, 0, W)
    wend = jnp.clip(wend, 0, W)
    return hstart, hend, wstart, wend


def roi_pool(x, rois, output_size, spatial_scale):
    """Forward of ROIPool: x [B,C,H,W], rois [K,5] -> [K,C,PH,PW] float32."""
    PH, PW = output_size
    x = x.astype(jnp.float32)
    rois = rois.astype(jnp.float32)
    B, C, H, W = x.shape
    K = rois.shape[0]

    batch_idx = rois[:, 0].astype(jnp.int32)
    hstart, hend, wstart, wend = _compute_bins(rois, spatial_scale, H, W, PH, PW)

    # Flat scalar table for the row bins (1-D SMEM pads far less than 2-D).
    hbins = jnp.concatenate([hstart, hend], axis=1)                      # (K, 2*PH)

    # Hoisted column masks + bin validity, precomputed once in plain JAX.
    col = jnp.arange(W, dtype=jnp.int32)
    wmask = ((col[None, None, :] >= wstart[:, :, None])
             & (col[None, None, :] < wend[:, :, None]))
    wmask = wmask.astype(jnp.float32)[..., None]                         # (K, PW, W, 1)
    valid = ((hend > hstart)[:, :, None] & (wend > wstart)[:, None, :])
    valid = valid.reshape(K, PH * PW, 1).astype(jnp.float32)             # (K, PH*PW, 1)

    # Sort ROIs by image index so consecutive grid steps reuse the same input
    # block and Pallas skips the repeated feature-map DMA; un-permute at the end.
    order = jnp.argsort(batch_idx)
    inv = jnp.argsort(order)
    batch_s = jnp.take(batch_idx, order, axis=0)
    hbins_s = jnp.take(hbins, order, axis=0).reshape(-1)                 # (K*2*PH,)
    wmask_s = jnp.take(wmask, order, axis=0)
    valid_s = jnp.take(valid, order, axis=0)

    # Channels-last so C is the lane axis inside the kernel.
    x_nhwc = jnp.transpose(x, (0, 2, 3, 1))                              # (B, H, W, C)

    kernel = functools.partial(_roi_pool_kernel, H=H, W=W, PH=PH, PW=PW)

    # VMEM budget: double-buffered blocks + band scratch, capped for portability.
    in_block = H * W * C * 4
    out_block = PH * PW * C * 4
    scratch = PH * W * C * 4
    small = (PW * W + PH * PW) * 4
    needed = 2 * (in_block + out_block + small) + scratch + (2 << 20)
    vmem_limit = int(min(max(needed, 32 << 20), 64 << 20))

    out_sorted = pl.pallas_call(
        kernel,
        out_shape=jax.ShapeDtypeStruct((K, PH * PW, C), jnp.float32),
        grid_spec=pltpu.PrefetchScalarGridSpec(
            num_scalar_prefetch=2,
            grid=(K,),
            in_specs=[
                pl.BlockSpec((1, PW, W, 1), lambda k, b, hb: (k, 0, 0, 0)),      # wmask
                pl.BlockSpec((1, PH * PW, 1), lambda k, b, hb: (k, 0, 0)),       # valid
                pl.BlockSpec((1, H, W, C), lambda k, b, hb: (b[k], 0, 0, 0)),    # features
            ],
            out_specs=pl.BlockSpec((1, PH * PW, C), lambda k, b, hb: (k, 0, 0)),
            scratch_shapes=[pltpu.VMEM((PH, W, C), jnp.float32)],
        ),
        compiler_params=pltpu.CompilerParams(
            dimension_semantics=("parallel",),
            vmem_limit_bytes=vmem_limit,
        ),
    )(batch_s, hbins_s, wmask_s, valid_s, x_nhwc)

    out = jnp.take(out_sorted, inv, axis=0)                 # undo the ROI sort
    # (K, PH*PW, C) -> (K, PH, PW, C) -> (K, C, PH, PW); output is small.
    return jnp.transpose(out.reshape(K, PH, PW, C), (0, 3, 1, 2))


def roi_pool_ref(x, rois, output_size, spatial_scale):
    """Pure-JAX reference (same semantics) for the correctness check."""
    PH, PW = output_size
    x = x.astype(jnp.float32)
    rois = rois.astype(jnp.float32)
    B, C, H, W = x.shape
    K = rois.shape[0]
    hstart, hend, wstart, wend = _compute_bins(rois, spatial_scale, H, W, PH, PW)
    batch_idx = rois[:, 0].astype(jnp.int32)
    row = jnp.arange(H)[:, None]
    col = jnp.arange(W)[None, :]
    outs = []
    for k in range(K):
        fm = x[batch_idx[k]]                                # (C, H, W)
        rows = []
        for ph in range(PH):
            hs, he = hstart[k, ph], hend[k, ph]
            cols = []
            for pw in range(PW):
                ws, we = wstart[k, pw], wend[k, pw]
                mask = (row >= hs) & (row < he) & (col >= ws) & (col < we)
                vals = jnp.where(mask[None, :, :], fm, -jnp.inf)
                m = jnp.max(vals, axis=(1, 2))              # (C,)
                empty = jnp.logical_or(he <= hs, we <= ws)
                cols.append(jnp.where(empty, jnp.zeros_like(m), m))
            rows.append(jnp.stack(cols, axis=-1))           # (C, PW)
        outs.append(jnp.stack(rows, axis=-2))               # (C, PH, PW)
    return jnp.stack(outs, axis=0)                          # (K, C, PH, PW)


class ROIPool:
    """Mirror of the PyTorch module (forward only)."""
    # TODO(synk): backward (roi_pool_backward / argmax bookkeeping) not implemented.

    def __init__(self, output_size, spatial_scale):
        self.output_size = tuple(output_size)
        self.spatial_scale = spatial_scale

    def __call__(self, x, rois):
        return roi_pool(x, rois, self.output_size, self.spatial_scale)

    def __repr__(self):
        return f"ROIPool(output_size={self.output_size}, spatial_scale={self.spatial_scale})"


if __name__ == "__main__":
    key = jax.random.PRNGKey(0)

    B, C, H, W = 2, 4, 16, 16
    x = jax.random.normal(key, (B, C, H, W), dtype=jnp.float32)

    # rois: (im_index, x1, y1, x2, y2) in input-image coordinates.
    # Unsorted image indices (exercises the sort/unsort), one ROI with negative
    # coordinates (round-half-away path) and one fully outside (empty bins -> 0).
    rois = jnp.array(
        [
            [0.0, 0.0, 0.0, 14.0, 14.0],
            [1.0, 4.0, 6.0, 20.0, 28.0],
            [0.0, 8.0, 2.0, 30.0, 18.0],
            [1.0, -3.0, -2.0, 9.0, 11.0],
            [0.0, -20.0, -20.0, -12.0, -12.0],
        ],
        dtype=jnp.float32,
    )

    pool = ROIPool(output_size=(3, 3), spatial_scale=1.0 / 2)
    out = jax.block_until_ready(pool(x, rois))

    ref = jax.block_until_ready(roi_pool_ref(x, rois, (3, 3), 1.0 / 2))
    assert out.shape == (rois.shape[0], C, 3, 3)
    assert jnp.allclose(out, ref, atol=1e-6), "mismatch vs reference"

    print("KERNEL_OK")
</pallas_src>

<mosaic_0001>
module attributes {stable_mosaic.version = 11 : i64} {
  func.func @_roi_pool_kernel(%arg0: i32, %arg1: memref<5xi32, #tpu.memory_space<smem>>, %arg2: memref<30xi32, #tpu.memory_space<smem>>, %arg3: memref<1x3x16x1xf32, #tpu.memory_space<vmem>>, %arg4: memref<1x9x1xf32, #tpu.memory_space<vmem>>, %arg5: memref<1x16x16x4xf32, #tpu.memory_space<vmem>>, %arg6: memref<1x9x4xf32, #tpu.memory_space<vmem>>, %arg7: memref<3x16x4xf32, #tpu.memory_space<vmem>>) attributes {dimension_semantics = [#tpu.dimension_semantics<parallel>], iteration_bounds = array<i64: 5>, scalar_prefetch = 2 : i64, scratch_operands = 1 : i64, tpu.core_type = #tpu.core_type<tc>, window_params = [{transform_indices = @transform_0, window_bounds = array<i64: 1, 3, 16, 1>}, {transform_indices = @transform_1, window_bounds = array<i64: 1, 9, 1>}, {transform_indices = @transform_2, window_bounds = array<i64: 1, 16, 16, 4>}, {transform_indices = @transform_3, window_bounds = array<i64: 1, 9, 4>}]} {
    %c6_i32 = arith.constant 6 : i32
    %0 = arith.muli %arg0, %c6_i32 : i32
    %1 = tpu.iota {dimensions = array<i32: 0>} : vector<16x16x1xi32>
    %c0_i32 = arith.constant 0 : i32
    %2 = arith.addi %0, %c0_i32 : i32
    %3 = arith.index_cast %2 : i32 to index
    %4 = memref.load %arg2[%3] : memref<30xi32, #tpu.memory_space<smem>>
    %c3_i32 = arith.constant 3 : i32
    %5 = arith.addi %0, %c3_i32 : i32
    %c0_i32_0 = arith.constant 0 : i32
    %6 = arith.addi %5, %c0_i32_0 : i32
    %7 = arith.index_cast %6 : i32 to index
    %8 = memref.load %arg2[%7] : memref<30xi32, #tpu.memory_space<smem>>
    %9 = vector.broadcast %4 : i32 to vector<16x16x1xi32>
    %10 = arith.cmpi sge, %1, %9 : vector<16x16x1xi32>
    %11 = vector.broadcast %8 : i32 to vector<16x16x1xi32>
    %12 = arith.cmpi slt, %1, %11 : vector<16x16x1xi32>
    %13 = arith.andi %10, %12 : vector<16x16x1xi1>
    %c0 = arith.constant 0 : index
    %c0_1 = arith.constant 0 : index
    %c0_2 = arith.constant 0 : index
    %c0_3 = arith.constant 0 : index
    %14 = vector.load %arg5[%c0, %c0_1, %c0_2, %c0_3] : memref<1x16x16x4xf32, #tpu.memory_space<vmem>>, vector<1x16x16x4xf32>
    %15 = vector.shape_cast %14 : vector<1x16x16x4xf32> to vector<16x16x4xf32>
    %cst = arith.constant 0xFF800000 : f32
    %16 = vector.shape_cast %13 : vector<16x16x1xi1> to vector<16x16x1xi1>
    %17 = vector.broadcast %16 : vector<16x16x1xi1> to vector<16x16x4xi1>
    %18 = vector.broadcast %cst : f32 to vector<16x16x4xf32>
    %19 = arith.select %17, %15, %18 : vector<16x16x4xi1>, vector<16x16x4xf32>
    %cst_4 = arith.constant dense<0xFF800000> : vector<16x4xf32>
    %20 = vector.multi_reduction <maximumf>, %19, %cst_4 [0] : vector<16x16x4xf32> to vector<16x4xf32>
    %c0_5 = arith.constant 0 : index
    %c0_6 = arith.constant 0 : index
    %c0_7 = arith.constant 0 : index
    %21 = vector.load %arg7[%c0_5, %c0_6, %c0_7] : memref<3x16x4xf32, #tpu.memory_space<vmem>>, vector<1x16x4xf32>
    %22 = vector.shape_cast %21 : vector<1x16x4xf32> to vector<16x4xf32>
    %23 = vector.shape_cast %20 : vector<16x4xf32> to vector<1x16x4xf32>
    tpu.vector_store %arg7[%c0_5, %c0_6, %c0_7], %23 {strides = array<i32>} : memref<3x16x4xf32, #tpu.memory_space<vmem>>, vector<1x16x4xf32>,
    %c1_i32 = arith.constant 1 : i32
    %24 = arith.addi %0, %c1_i32 : i32
    %25 = arith.index_cast %24 : i32 to index
    %26 = memref.load %arg2[%25] : memref<30xi32, #tpu.memory_space<smem>>
    %c3_i32_8 = arith.constant 3 : i32
    %27 = arith.addi %0, %c3_i32_8 : i32
    %c1_i32_9 = arith.constant 1 : i32
    %28 = arith.addi %27, %c1_i32_9 : i32
    %29 = arith.index_cast %28 : i32 to index
    %30 = memref.load %arg2[%29] : memref<30xi32, #tpu.memory_space<smem>>
    %31 = vector.broadcast %26 : i32 to vector<16x16x1xi32>
    %32 = arith.cmpi sge, %1, %31 : vector<16x16x1xi32>
    %33 = vector.broadcast %30 : i32 to vector<16x16x1xi32>
    %34 = arith.cmpi slt, %1, %33 : vector<16x16x1xi32>
    %35 = arith.andi %32, %34 : vector<16x16x1xi1>
    %c0_10 = arith.constant 0 : index
    %c0_11 = arith.constant 0 : index
    %c0_12 = arith.constant 0 : index
    %c0_13 = arith.constant 0 : index
    %36 = vector.load %arg5[%c0_10, %c0_11, %c0_12, %c0_13] : memref<1x16x16x4xf32, #tpu.memory_space<vmem>>, vector<1x16x16x4xf32>
    %37 = vector.shape_cast %36 : vector<1x16x16x4xf32> to vector<16x16x4xf32>
    %cst_14 = arith.constant 0xFF800000 : f32
    %38 = vector.shape_cast %35 : vector<16x16x1xi1> to vector<16x16x1xi1>
    %39 = vector.broadcast %38 : vector<16x16x1xi1> to vector<16x16x4xi1>
    %40 = vector.broadcast %cst_14 : f32 to vector<16x16x4xf32>
    %41 = arith.select %39, %37, %40 : vector<16x16x4xi1>, vector<16x16x4xf32>
    %cst_15 = arith.constant dense<0xFF800000> : vector<16x4xf32>
    %42 = vector.multi_reduction <maximumf>, %41, %cst_15 [0] : vector<16x16x4xf32> to vector<16x4xf32>
    %c1 = arith.constant 1 : index
    %c0_16 = arith.constant 0 : index
    %c0_17 = arith.constant 0 : index
    %43 = vector.load %arg7[%c1, %c0_16, %c0_17] : memref<3x16x4xf32, #tpu.memory_space<vmem>>, vector<1x16x4xf32>
    %44 = vector.shape_cast %43 : vector<1x16x4xf32> to vector<16x4xf32>
    %45 = vector.shape_cast %42 : vector<16x4xf32> to vector<1x16x4xf32>
    tpu.vector_store %arg7[%c1, %c0_16, %c0_17], %45 {strides = array<i32>} : memref<3x16x4xf32, #tpu.memory_space<vmem>>, vector<1x16x4xf32>,
    %c2_i32 = arith.constant 2 : i32
    %46 = arith.addi %0, %c2_i32 : i32
    %47 = arith.index_cast %46 : i32 to index
    %48 = memref.load %arg2[%47] : memref<30xi32, #tpu.memory_space<smem>>
    %c3_i32_18 = arith.constant 3 : i32
    %49 = arith.addi %0, %c3_i32_18 : i32
    %c2_i32_19 = arith.constant 2 : i32
    %50 = arith.addi %49, %c2_i32_19 : i32
    %51 = arith.index_cast %50 : i32 to index
    %52 = memref.load %arg2[%51] : memref<30xi32, #tpu.memory_space<smem>>
    %53 = vector.broadcast %48 : i32 to vector<16x16x1xi32>
    %54 = arith.cmpi sge, %1, %53 : vector<16x16x1xi32>
    %55 = vector.broadcast %52 : i32 to vector<16x16x1xi32>
    %56 = arith.cmpi slt, %1, %55 : vector<16x16x1xi32>
    %57 = arith.andi %54, %56 : vector<16x16x1xi1>
    %c0_20 = arith.constant 0 : index
    %c0_21 = arith.constant 0 : index
    %c0_22 = arith.constant 0 : index
    %c0_23 = arith.constant 0 : index
    %58 = vector.load %arg5[%c0_20, %c0_21, %c0_22, %c0_23] : memref<1x16x16x4xf32, #tpu.memory_space<vmem>>, vector<1x16x16x4xf32>
    %59 = vector.shape_cast %58 : vector<1x16x16x4xf32> to vector<16x16x4xf32>
    %cst_24 = arith.constant 0xFF800000 : f32
    %60 = vector.shape_cast %57 : vector<16x16x1xi1> to vector<16x16x1xi1>
    %61 = vector.broadcast %60 : vector<16x16x1xi1> to vector<16x16x4xi1>
    %62 = vector.broadcast %cst_24 : f32 to vector<16x16x4xf32>
    %63 = arith.select %61, %59, %62 : vector<16x16x4xi1>, vector<16x16x4xf32>
    %cst_25 = arith.constant dense<0xFF800000> : vector<16x4xf32>
    %64 = vector.multi_reduction <maximumf>, %63, %cst_25 [0] : vector<16x16x4xf32> to vector<16x4xf32>
    %c2 = arith.constant 2 : index
    %c0_26 = arith.constant 0 : index
    %c0_27 = arith.constant 0 : index
    %65 = vector.load %arg7[%c2, %c0_26, %c0_27] : memref<3x16x4xf32, #tpu.memory_space<vmem>>, vector<1x16x4xf32>
    %66 = vector.shape_cast %65 : vector<1x16x4xf32> to vector<16x4xf32>
    %67 = vector.shape_cast %64 : vector<16x4xf32> to vector<1x16x4xf32>
    tpu.vector_store %arg7[%c2, %c0_26, %c0_27], %67 {strides = array<i32>} : memref<3x16x4xf32, #tpu.memory_space<vmem>>, vector<1x16x4xf32>,
    %c0_28 = arith.constant 0 : index
    %c0_29 = arith.constant 0 : index
    %c0_30 = arith.constant 0 : index
    %c0_31 = arith.constant 0 : index
    %68 = vector.load %arg3[%c0_28, %c0_29, %c0_30, %c0_31] : memref<1x3x16x1xf32, #tpu.memory_space<vmem>>, vector<1x3x16x1xf32>
    %69 = vector.shape_cast %68 : vector<1x3x16x1xf32> to vector<3x16x1xf32>
    %c0_32 = arith.constant 0 : index
    %c0_33 = arith.constant 0 : index
    %c0_34 = arith.constant 0 : index
    %70 = vector.load %arg7[%c0_32, %c0_33, %c0_34] : memref<3x16x4xf32, #tpu.memory_space<vmem>>, vector<1x16x4xf32>
    %71 = vector.shape_cast %70 : vector<1x16x4xf32> to vector<16x4xf32>
    %cst_35 = arith.constant 0.000000e+00 : f32
    %72 = vector.broadcast %cst_35 : f32 to vector<3x16x1xf32>
    %73 = arith.cmpf ogt, %69, %72 : vector<3x16x1xf32>
    %74 = vector.shape_cast %71 : vector<16x4xf32> to vector<1x16x4xf32>
    %cst_36 = arith.constant 0xFF800000 : f32
    %75 = vector.shape_cast %73 : vector<3x16x1xi1> to vector<3x16x1xi1>
    %76 = vector.broadcast %75 : vector<3x16x1xi1> to vector<3x16x4xi1>
    %77 = vector.shape_cast %74 : vector<1x16x4xf32> to vector<1x16x4xf32>
    %78 = vector.broadcast %77 : vector<1x16x4xf32> to vector<3x16x4xf32>
    %79 = vector.broadcast %cst_36 : f32 to vector<3x16x4xf32>
    %80 = arith.select %76, %78, %79 : vector<3x16x4xi1>, vector<3x16x4xf32>
    %cst_37 = arith.constant dense<0xFF800000> : vector<3x4xf32>
    %81 = vector.multi_reduction <maximumf>, %80, %cst_37 [1] : vector<3x16x4xf32> to vector<3x4xf32>
    %c0_38 = arith.constant 0 : index
    %c0_39 = arith.constant 0 : index
    %c0_40 = arith.constant 0 : index
    %82 = vector.load %arg4[%c0_38, %c0_39, %c0_40] : memref<1x9x1xf32, #tpu.memory_space<vmem>>, vector<1x3x1xf32>
    %83 = vector.shape_cast %82 : vector<1x3x1xf32> to vector<3x1xf32>
    %cst_41 = arith.constant 0.000000e+00 : f32
    %84 = vector.broadcast %cst_41 : f32 to vector<3x1xf32>
    %85 = arith.cmpf ogt, %83, %84 : vector<3x1xf32>
    %cst_42 = arith.constant 0.000000e+00 : f32
    %86 = vector.shape_cast %85 : vector<3x1xi1> to vector<3x1xi1>
    %87 = vector.broadcast %86 : vector<3x1xi1> to vector<3x4xi1>
    %88 = vector.broadcast %cst_42 : f32 to vector<3x4xf32>
    %89 = arith.select %87, %81, %88 : vector<3x4xi1>, vector<3x4xf32>
    %c0_43 = arith.constant 0 : index
    %c0_44 = arith.constant 0 : index
    %c0_45 = arith.constant 0 : index
    %90 = vector.load %arg6[%c0_43, %c0_44, %c0_45] : memref<1x9x4xf32, #tpu.memory_space<vmem>>, vector<1x3x4xf32>
    %91 = vector.shape_cast %90 : vector<1x3x4xf32> to vector<3x4xf32>
    %92 = vector.shape_cast %89 : vector<3x4xf32> to vector<1x3x4xf32>
    tpu.vector_store %arg6[%c0_43, %c0_44, %c0_45], %92 {strides = array<i32>} : memref<1x9x4xf32, #tpu.memory_space<vmem>>, vector<1x3x4xf32>,
    %c1_46 = arith.constant 1 : index
    %c0_47 = arith.constant 0 : index
    %c0_48 = arith.constant 0 : index
    %93 = vector.load %arg7[%c1_46, %c0_47, %c0_48] : memref<3x16x4xf32, #tpu.memory_space<vmem>>, vector<1x16x4xf32>
    %94 = vector.shape_cast %93 : vector<1x16x4xf32> to vector<16x4xf32>
    %cst_49 = arith.constant 0.000000e+00 : f32
    %95 = vector.broadcast %cst_49 : f32 to vector<3x16x1xf32>
    %96 = arith.cmpf ogt, %69, %95 : vector<3x16x1xf32>
    %97 = vector.shape_cast %94 : vector<16x4xf32> to vector<1x16x4xf32>
    %cst_50 = arith.constant 0xFF800000 : f32
    %98 = vector.shape_cast %96 : vector<3x16x1xi1> to vector<3x16x1xi1>
    %99 = vector.broadcast %98 : vector<3x16x1xi1> to vector<3x16x4xi1>
    %100 = vector.shape_cast %97 : vector<1x16x4xf32> to vector<1x16x4xf32>
    %101 = vector.broadcast %100 : vector<1x16x4xf32> to vector<3x16x4xf32>
    %102 = vector.broadcast %cst_50 : f32 to vector<3x16x4xf32>
    %103 = arith.select %99, %101, %102 : vector<3x16x4xi1>, vector<3x16x4xf32>
    %cst_51 = arith.constant dense<0xFF800000> : vector<3x4xf32>
    %104 = vector.multi_reduction <maximumf>, %103, %cst_51 [1] : vector<3x16x4xf32> to vector<3x4xf32>
    %c0_52 = arith.constant 0 : index
    %c3 = arith.constant 3 : index
    %c0_53 = arith.constant 0 : index
    %105 = vector.load %arg4[%c0_52, %c3, %c0_53] : memref<1x9x1xf32, #tpu.memory_space<vmem>>, vector<1x3x1xf32>
    %106 = vector.shape_cast %105 : vector<1x3x1xf32> to vector<3x1xf32>
    %cst_54 = arith.constant 0.000000e+00 : f32
    %107 = vector.broadcast %cst_54 : f32 to vector<3x1xf32>
    %108 = arith.cmpf ogt, %106, %107 : vector<3x1xf32>
    %cst_55 = arith.constant 0.000000e+00 : f32
    %109 = vector.shape_cast %108 : vector<3x1xi1> to vector<3x1xi1>
    %110 = vector.broadcast %109 : vector<3x1xi1> to vector<3x4xi1>
    %111 = vector.broadcast %cst_55 : f32 to vector<3x4xf32>
    %112 = arith.select %110, %104, %111 : vector<3x4xi1>, vector<3x4xf32>
    %c0_56 = arith.constant 0 : index
    %c3_57 = arith.constant 3 : index
    %c0_58 = arith.constant 0 : index
    %113 = vector.load %arg6[%c0_56, %c3_57, %c0_58] : memref<1x9x4xf32, #tpu.memory_space<vmem>>, vector<1x3x4xf32>
    %114 = vector.shape_cast %113 : vector<1x3x4xf32> to vector<3x4xf32>
    %115 = vector.shape_cast %112 : vector<3x4xf32> to vector<1x3x4xf32>
    tpu.vector_store %arg6[%c0_56, %c3_57, %c0_58], %115 {strides = array<i32>} : memref<1x9x4xf32, #tpu.memory_space<vmem>>, vector<1x3x4xf32>,
    %c2_59 = arith.constant 2 : index
    %c0_60 = arith.constant 0 : index
    %c0_61 = arith.constant 0 : index
    %116 = vector.load %arg7[%c2_59, %c0_60, %c0_61] : memref<3x16x4xf32, #tpu.memory_space<vmem>>, vector<1x16x4xf32>
    %117 = vector.shape_cast %116 : vector<1x16x4xf32> to vector<16x4xf32>
    %cst_62 = arith.constant 0.000000e+00 : f32
    %118 = vector.broadcast %cst_62 : f32 to vector<3x16x1xf32>
    %119 = arith.cmpf ogt, %69, %118 : vector<3x16x1xf32>
    %120 = vector.shape_cast %117 : vector<16x4xf32> to vector<1x16x4xf32>
    %cst_63 = arith.constant 0xFF800000 : f32
    %121 = vector.shape_cast %119 : vector<3x16x1xi1> to vector<3x16x1xi1>
    %122 = vector.broadcast %121 : vector<3x16x1xi1> to vector<3x16x4xi1>
    %123 = vector.shape_cast %120 : vector<1x16x4xf32> to vector<1x16x4xf32>
    %124 = vector.broadcast %123 : vector<1x16x4xf32> to vector<3x16x4xf32>
    %125 = vector.broadcast %cst_63 : f32 to vector<3x16x4xf32>
    %126 = arith.select %122, %124, %125 : vector<3x16x4xi1>, vector<3x16x4xf32>
    %cst_64 = arith.constant dense<0xFF800000> : vector<3x4xf32>
    %127 = vector.multi_reduction <maximumf>, %126, %cst_64 [1] : vector<3x16x4xf32> to vector<3x4xf32>
    %c0_65 = arith.constant 0 : index
    %c6 = arith.constant 6 : index
    %c0_66 = arith.constant 0 : index
    %128 = vector.load %arg4[%c0_65, %c6, %c0_66] : memref<1x9x1xf32, #tpu.memory_space<vmem>>, vector<1x3x1xf32>
    %129 = vector.shape_cast %128 : vector<1x3x1xf32> to vector<3x1xf32>
    %cst_67 = arith.constant 0.000000e+00 : f32
    %130 = vector.broadcast %cst_67 : f32 to vector<3x1xf32>
    %131 = arith.cmpf ogt, %129, %130 : vector<3x1xf32>
    %cst_68 = arith.constant 0.000000e+00 : f32
    %132 = vector.shape_cast %131 : vector<3x1xi1> to vector<3x1xi1>
    %133 = vector.broadcast %132 : vector<3x1xi1> to vector<3x4xi1>
    %134 = vector.broadcast %cst_68 : f32 to vector<3x4xf32>
    %135 = arith.select %133, %127, %134 : vector<3x4xi1>, vector<3x4xf32>
    %c0_69 = arith.constant 0 : index
    %c6_70 = arith.constant 6 : index
    %c0_71 = arith.constant 0 : index
    %136 = vector.load %arg6[%c0_69, %c6_70, %c0_71] : memref<1x9x4xf32, #tpu.memory_space<vmem>>, vector<1x3x4xf32>
    %137 = vector.shape_cast %136 : vector<1x3x4xf32> to vector<3x4xf32>
    %138 = vector.shape_cast %135 : vector<3x4xf32> to vector<1x3x4xf32>
    tpu.vector_store %arg6[%c0_69, %c6_70, %c0_71], %138 {strides = array<i32>} : memref<1x9x4xf32, #tpu.memory_space<vmem>>, vector<1x3x4xf32>,
    return
  }
  func.func @transform_0(%arg0: i32, %arg1: memref<5xi32, #tpu.memory_space<smem>>, %arg2: memref<30xi32, #tpu.memory_space<smem>>) -> (i32, i32, i32, i32) {
    %c0_i32 = arith.constant 0 : i32
    %c0_i32_0 = arith.constant 0 : i32
    %c0_i32_1 = arith.constant 0 : i32
    %c0_i32_2 = arith.constant 0 : i32
    return %arg0, %c0_i32, %c0_i32_0, %c0_i32_1 : i32, i32, i32, i32
  }
  func.func @transform_1(%arg0: i32, %arg1: memref<5xi32, #tpu.memory_space<smem>>, %arg2: memref<30xi32, #tpu.memory_space<smem>>) -> (i32, i32, i32) {
    %c0_i32 = arith.constant 0 : i32
    %c0_i32_0 = arith.constant 0 : i32
    %c0_i32_1 = arith.constant 0 : i32
    return %arg0, %c0_i32, %c0_i32_0 : i32, i32, i32
  }
  func.func @transform_2(%arg0: i32, %arg1: memref<5xi32, #tpu.memory_space<smem>>, %arg2: memref<30xi32, #tpu.memory_space<smem>>) -> (i32, i32, i32, i32) {
    %0 = arith.index_cast %arg0 : i32 to index
    %1 = memref.load %arg1[%0] : memref<5xi32, #tpu.memory_space<smem>>
    %c0_i32 = arith.constant 0 : i32
    %c0_i32_0 = arith.constant 0 : i32
    %c0_i32_1 = arith.constant 0 : i32
    %c0_i32_2 = arith.constant 0 : i32
    return %1, %c0_i32, %c0_i32_0, %c0_i32_1 : i32, i32, i32, i32
  }
  func.func @transform_3(%arg0: i32, %arg1: memref<5xi32, #tpu.memory_space<smem>>, %arg2: memref<30xi32, #tpu.memory_space<smem>>) -> (i32, i32, i32) {
    %c0_i32 = arith.constant 0 : i32
    %c0_i32_0 = arith.constant 0 : i32
    %c0_i32_1 = arith.constant 0 : i32
    return %arg0, %c0_i32, %c0_i32_0 : i32, i32, i32
  }
}

</mosaic_0001>

<llo_original>
// kernel: tpu_custom_call.1
$region0: #{tpu_custom_call.1}
  #allocation0 [shape = 'u32[]', space=smem, size = 0x4, offset = 0x4, fixed_abs, tag = 'smem constant byte address 0x4 - core index']
  #allocation1 [shape = 'u32[144,128]{1,0:T(1,128)}', space=vmem, size = 0x12000, scoped, tag = 'internal scratch']
  #allocation2 [shape = 'f32[3,16,4]{2,1,0:T(8,128)}', space=vmem, size = 0x6000, scoped, tag = 'scratch operand']
  #allocation3 [shape = 's32[1]{0}', space=sflag, size = 0x4, scoped, tag = 'scoped memory for tpu_custom_call.1']
  #allocation4 [shape = 'u8[512]{0}', space=smem, size = 0x200, scoped, tag = 'prefetched SMEM operand 0']
  #allocation5 [shape = 'u8[512]{0}', space=smem, size = 0x200, scoped, tag = 'prefetched SMEM operand 1']
  %s0 = inlined_call_operand.vmem [shape: s32[5], index: 0, kind: input, shape index: {}]
  %s1 = inlined_call_operand.vmem [shape: s32[30], index: 1, kind: input, shape index: {}]
  %s2 = inlined_call_operand.vmem [shape: f32[5,3,16,1], index: 2, kind: input, shape index: {}]
  %s3 = inlined_call_operand.vmem [shape: f32[5,9,1], index: 3, kind: input, shape index: {}]
  %s4 = inlined_call_operand.vmem [shape: f32[2,16,16,4], index: 4, kind: input, shape index: {}]
  %s5 = inlined_call_operand.vmem [shape: f32[5,9,4], index: 5, kind: output, shape index: {}]
  %s6 = sld [smem:[#allocation0]]
  $region45: #{tpu_custom_call.1} parent=0
    _
  %s8 = ssub.s32 1, %s6
  %s9 = scalar_select 0, %s8, %s6
  %s10 = sshll.u32 %s0, 4
  %s11 = int_to_ptr.vmem [resolvable:$true] %s10
  %13 = dma.vmem_to_smem %s11, 16, [#allocation4], [#allocation3]
  %s14 = sshll.u32 %s1, 4
  %s15 = int_to_ptr.vmem [resolvable:$true] %s14
  %17 = dma.vmem_to_smem %s15, 16, [#allocation5], [#allocation3]
  %18 = dma.done [#allocation3], 32
  %19 = sfence
  loop: start=0, step=1, limit=7
  $region2: #{tpu_custom_call.1} parent=0 // loop_pre_header
    _
  $region3: #{tpu_custom_call.1} parent=0 // loop_header
    %s21 = sphi 0, %s25
    %p22 = scmp.ge.s32.totalorder %s21, 7
    %s31 = sphi 0, %s33
    %s34 = sphi 0, %s31
    %s35 = sphi 0, %s34
    %s51 = sphi 0, %s35
    %s57 = sphi 0, %s59
    %s60 = sphi 0, %s57
    %s61 = sphi 0, %s60
    %s77 = sphi 0, %s61
    %s85 = sphi 0, %s87
    %s88 = sphi 0, %s85
    %s89 = sphi 0, %s88
    %s105 = sphi 0, %s89
    %s111 = sphi 0, %s113
    %s114 = sphi 0, %s111
    %s115 = sphi 0, %s114
    %s131 = sphi 0, %s115
  $region4: #{tpu_custom_call.1} parent=0 // loop_header_branch
    %24 = sbr.rel (%p22) target = $region8
  $region5: #{tpu_custom_call.1} parent=0 // loop_body
    %s26 = ssub.s32 %s21, 1
    %s27 = ssub.s32 %s21, 2
    %s28 = sadd.s32 %s21, 1
    %s29 = ssub.s32 %s21, %s28
    %p30 = scmp.eq.s32.totalorder %s29, 0
    %s32 = sadd.s32 %s31, 1
    %s33 = scalar_select %p30, %s31, %s32
    %p36 = pneg %p30
    %p37 = scmp.eq.s32.totalorder %s21, 4
    %p38 = por %p36, %p37
    %p39 = scmp.ne.s32.totalorder %s31, %s34
    %p40 = scmp.eq.s32.totalorder %s21, 0
    %p41 = por %p39, %p40
    %p42 = scmp.ne.s32.totalorder %s31, %s34
    %p43 = scmp.eq.s32.totalorder %s26, 4
    %p44 = por %p42, %p43
    %p45 = scmp.ne.s32.totalorder %s34, %s35
    %p46 = scmp.eq.s32.totalorder %s26, 0
    %p47 = por %p45, %p46
    %p48 = scmp.ne.s32.totalorder %s34, %s35
    %p49 = scmp.eq.s32.totalorder %s27, 4
    %p50 = por %p48, %p49
    %p52 = scmp.ne.s32.totalorder %s35, %s51
    %p53 = scmp.eq.s32.totalorder %s27, 0
    %p54 = por %p52, %p53
    %s55 = ssub.s32 %s21, %s28
    %p56 = scmp.eq.s32.totalorder %s55, 0
    %s58 = sadd.s32 %s57, 1
    %s59 = scalar_select %p56, %s57, %s58
    %p62 = pneg %p56
    %p63 = scmp.eq.s32.totalorder %s21, 4
    %p64 = por %p62, %p63
    %p65 = scmp.ne.s32.totalorder %s57, %s60
    %p66 = scmp.eq.s32.totalorder %s21, 0
    %p67 = por %p65, %p66
    %p68 = scmp.ne.s32.totalorder %s57, %s60
    %p69 = scmp.eq.s32.totalorder %s26, 4
    %p70 = por %p68, %p69
    %p71 = scmp.ne.s32.totalorder %s60, %s61
    %p72 = scmp.eq.s32.totalorder %s26, 0
    %p73 = por %p71, %p72
    %p74 = scmp.ne.s32.totalorder %s60, %s61
    %p75 = scmp.eq.s32.totalorder %s27, 4
    %p76 = por %p74, %p75
    %p78 = scmp.ne.s32.totalorder %s61, %s77
    %p79 = scmp.eq.s32.totalorder %s27, 0
    %p80 = por %p78, %p79
    %s81 = sld [smem:[#allocation4 + %s21]]
    %s82 = sld [smem:[#allocation4 + %s28]]
    %s83 = ssub.s32 %s81, %s82
    %p84 = scmp.eq.s32.totalorder %s83, 0
    %s86 = sadd.s32 %s85, 1
    %s87 = scalar_select %p84, %s85, %s86
    %p90 = pneg %p84
    %p91 = scmp.eq.s32.totalorder %s21, 4
    %p92 = por %p90, %p91
    %p93 = scmp.ne.s32.totalorder %s85, %s88
    %p94 = scmp.eq.s32.totalorder %s21, 0
    %p95 = por %p93, %p94
    %p96 = scmp.ne.s32.totalorder %s85, %s88
    %p97 = scmp.eq.s32.totalorder %s26, 4
    %p98 = por %p96, %p97
    %p99 = scmp.ne.s32.totalorder %s88, %s89
    %p100 = scmp.eq.s32.totalorder %s26, 0
    %p101 = por %p99, %p100
    %p102 = scmp.ne.s32.totalorder %s88, %s89
    %p103 = scmp.eq.s32.totalorder %s27, 4
    %p104 = por %p102, %p103
    %p106 = scmp.ne.s32.totalorder %s89, %s105
    %p107 = scmp.eq.s32.totalorder %s27, 0
    %p108 = por %p106, %p107
    %s109 = ssub.s32 %s21, %s28
    %p110 = scmp.eq.s32.totalorder %s109, 0
    %s112 = sadd.s32 %s111, 1
    %s113 = scalar_select %p110, %s111, %s112
    %p116 = pneg %p110
    %p117 = scmp.eq.s32.totalorder %s21, 4
    %p118 = por %p116, %p117
    %p119 = scmp.ne.s32.totalorder %s111, %s114
    %p120 = scmp.eq.s32.totalorder %s21, 0
    %p121 = por %p119, %p120
    %p122 = scmp.ne.s32.totalorder %s111, %s114
    %p123 = scmp.eq.s32.totalorder %s26, 4
    %p124 = por %p122, %p123
    %p125 = scmp.ne.s32.totalorder %s114, %s115
    %p126 = scmp.eq.s32.totalorder %s26, 0
    %p127 = por %p125, %p126
    %p128 = scmp.ne.s32.totalorder %s114, %s115
    %p129 = scmp.eq.s32.totalorder %s27, 4
    %p130 = por %p128, %p129
    %p132 = scmp.ne.s32.totalorder %s115, %s131
    %p133 = scmp.eq.s32.totalorder %s27, 0
    %p134 = por %p132, %p133
    %p135 = scmp.le.s32.totalorder 1, %s21
    %p136 = scmp.lt.s32.totalorder %s21, 6
    %p137 = pnand %p135, %p136
    %p138 = pneg %p137
    // Predicated region
    $region9: #{tpu_custom_call.1} parent=5 // pred_check
      _
    $region10: #{tpu_custom_call.1} parent=5 // pred_check_branch
      %140 = sbr.rel (%p137) target = $region12
    $region11: #{tpu_custom_call.1} parent=5 // pred_region
      %s141 = ssub.s32 %s21, 1
    $region12: #{tpu_custom_call.1} parent=5 // pred_fallthru
      _
    %p142 = scmp.lt.s32.totalorder %s21, 5
    // Predicated region
    $region13: #{tpu_custom_call.1} parent=5 // pred_check
      %p143 = pneg %p142
    $region14: #{tpu_custom_call.1} parent=5 // pred_check_branch
      %145 = sbr.rel (%p143) target = $region16
    $region15: #{tpu_custom_call.1} parent=5 // pred_region
      // Predicated region
      $region17: #{tpu_custom_call.1} parent=15 // pred_check
        %p146 = pneg %p41
      $region18: #{tpu_custom_call.1} parent=15 // pred_check_branch
        %148 = sbr.rel (%p146) target = $region20
      $region19: #{tpu_custom_call.1} parent=15 // pred_region
        %p149 = scmp.lt.s32.totalorder %s21, 4
        %s150 = scalar_select %p149, %s21, 4
        %s151 = smul.addr %s150, 6
        %s152 = smul.addr %s151, 8
        %s153 = scalar_lea.vmem %s2, %s152
      $region20: #{tpu_custom_call.1} parent=15 // pred_fallthru
        _
      // Predicated region
      $region21: #{tpu_custom_call.1} parent=15 // pred_check
        %p154 = pneg %p67
      $region22: #{tpu_custom_call.1} parent=15 // pred_check_branch
        %156 = sbr.rel (%p154) target = $region24
      $region23: #{tpu_custom_call.1} parent=15 // pred_region
        %p157 = scmp.lt.s32.totalorder %s21, 4
        %s158 = scalar_select %p157, %s21, 4
        %s159 = smul.addr %s158, 2
        %s160 = smul.addr %s159, 8
        %s161 = scalar_lea.vmem %s3, %s160
      $region24: #{tpu_custom_call.1} parent=15 // pred_fallthru
        _
      // Predicated region
      $region25: #{tpu_custom_call.1} parent=15 // pred_check
        %p162 = pneg %p95
      $region26: #{tpu_custom_call.1} parent=15 // pred_check_branch
        %164 = sbr.rel (%p162) target = $region28
      $region27: #{tpu_custom_call.1} parent=15 // pred_region
        %s165 = sld [smem:[#allocation4 + %s21]]
        %p166 = scmp.lt.s32.totalorder %s165, 1
        %s167 = scalar_select %p166, %s165, 1
        %s168 = smul.addr %s167, 32
        %s169 = smul.addr %s168, 8
        %s170 = scalar_lea.vmem %s4, %s169
        %s171 = sld [smem:[#allocation4 + %s21]]
      $region28: #{tpu_custom_call.1} parent=15 // pred_fallthru
        _
    $region16: #{tpu_custom_call.1} parent=5 // pred_fallthru
      _
    %p172 = scmp.le.s32.totalorder 1, %s21
    %p173 = scmp.lt.s32.totalorder %s21, 6
    %p174 = pnand %p172, %p173
    %p175 = pneg %p174
    // Predicated region
    $region29: #{tpu_custom_call.1} parent=5 // pred_check
      _
    $region30: #{tpu_custom_call.1} parent=5 // pred_check_branch
      %177 = sbr.rel (%p174) target = $region32
    $region31: #{tpu_custom_call.1} parent=5 // pred_region
      %s178 = ssub.s32 %s21, 1
      %p179 = scmp.lt.s32.totalorder %s26, 4
      %s180 = scalar_select %p179, %s26, 4
      %s181 = smul.addr %s180, 6
      %s182 = smul.addr %s181, 8
      %s183 = scalar_lea.vmem %s2, %s182
      %p184 = pneg %p47
      %p185 = pneg %p44
      %p186 = scmp.lt.s32.totalorder %s26, 4
      %s187 = scalar_select %p186, %s26, 4
      %s188 = smul.addr %s187, 2
      %s189 = smul.addr %s188, 8
      %s190 = scalar_lea.vmem %s3, %s189
      %p191 = pneg %p73
      %p192 = pneg %p70
      %s193 = sld [smem:[#allocation4 + %s26]]
      %p194 = scmp.lt.s32.totalorder %s193, 1
      %s195 = scalar_select %p194, %s193, 1
      %s196 = smul.addr %s195, 32
      %s197 = smul.addr %s196, 8
      %s198 = scalar_lea.vmem %s4, %s197
      %p199 = pneg %p101
      %p200 = pneg %p98
      %p201 = pneg %p127
      %p202 = pneg %p124
      %p203 = scmp.lt.s32.totalorder %s26, 4
      %s204 = scalar_select %p203, %s26, 4
      %s205 = smul.addr %s204, 2
      %s206 = smul.addr %s205, 8
      %s207 = scalar_lea.vmem %s5, %s206
      %p208 = scmp.lt.s32.totalorder %s26, 4
      %s209 = scalar_select %p208, %s26, 4
      %s210 = smul.addr %s209, 6
      %s211 = smul.addr %s210, 8
      %s212 = scalar_lea.vmem %s2, %s211
      %p213 = scmp.lt.s32.totalorder %s26, 4
      %s214 = scalar_select %p213, %s26, 4
      %s215 = smul.addr %s214, 2
      %s216 = smul.addr %s215, 8
      %s217 = scalar_lea.vmem %s3, %s216
      %s218 = sld [smem:[#allocation4 + %s26]]
      %p219 = scmp.lt.s32.totalorder %s218, 1
      %s220 = scalar_select %p219, %s218, 1
      %s221 = smul.addr %s220, 32
      %s222 = smul.addr %s221, 8
      %s223 = scalar_lea.vmem %s4, %s222
      %s224 = sld [smem:[#allocation4 + %s26]]
      %p225 = scmp.lt.s32.totalorder %s26, 4
      %s226 = scalar_select %p225, %s26, 4
      %s227 = smul.addr %s226, 2
      %s228 = smul.addr %s227, 8
      %s229 = scalar_lea.vmem %s5, %s228
      %s230 = smul.u32 %s26, 6
      %s231 = sld [smem:[#allocation5 + %s230]]
      %s232 = sadd.s32 %s230, 3
      %s233 = sld [smem:[#allocation5 + %s232]]
      %v234 = vstv %s231
      %vm235 = vcmp.le.s32.totalorder %v234, 0
      %vm236 = vcmp.le.s32.totalorder %v234, 1
      %vm237 = vcmp.le.s32.totalorder %v234, 2
      %vm238 = vcmp.le.s32.totalorder %v234, 3
      %vm239 = vcmp.le.s32.totalorder %v234, 4
      %vm240 = vcmp.le.s32.totalorder %v234, 5
      %vm241 = vcmp.le.s32.totalorder %v234, 6
      %vm242 = vcmp.le.s32.totalorder %v234, 7
      %vm243 = vcmp.le.s32.totalorder %v234, 8
      %vm244 = vcmp.le.s32.totalorder %v234, 9
      %vm245 = vcmp.le.s32.totalorder %v234, 10
      %vm246 = vcmp.le.s32.totalorder %v234, 11
      %vm247 = vcmp.le.s32.totalorder %v234, 12
      %vm248 = vcmp.le.s32.totalorder %v234, 13
      %vm249 = vcmp.le.s32.totalorder %v234, 14
      %vm250 = vcmp.le.s32.totalorder %v234, 15
      %v251 = vstv %s233
      %vm252 = vcmp.gt.s32.totalorder %v251, 0
      %vm253 = vcmp.gt.s32.totalorder %v251, 1
      %vm254 = vcmp.gt.s32.totalorder %v251, 2
      %vm255 = vcmp.gt.s32.totalorder %v251, 3
      %vm256 = vcmp.gt.s32.totalorder %v251, 4
      %vm257 = vcmp.gt.s32.totalorder %v251, 5
      %vm258 = vcmp.gt.s32.totalorder %v251, 6
      %vm259 = vcmp.gt.s32.totalorder %v251, 7
      %vm260 = vcmp.gt.s32.totalorder %v251, 8
      %vm261 = vcmp.gt.s32.totalorder %v251, 9
      %vm262 = vcmp.gt.s32.totalorder %v251, 10
      %vm263 = vcmp.gt.s32.totalorder %v251, 11
      %vm264 = vcmp.gt.s32.totalorder %v251, 12
      %vm265 = vcmp.gt.s32.totalorder %v251, 13
      %vm266 = vcmp.gt.s32.totalorder %v251, 14
      %vm267 = vcmp.gt.s32.totalorder %v251, 15
      %vm268 = vmand %vm235, %vm252
      %vm269 = vmand %vm236, %vm253
      %vm270 = vmand %vm237, %vm254
      %vm271 = vmand %vm238, %vm255
      %vm272 = vmand %vm239, %vm256
      %vm273 = vmand %vm240, %vm257
      %vm274 = vmand %vm241, %vm258
      %vm275 = vmand %vm242, %vm259
      %vm276 = vmand %vm243, %vm260
      %vm277 = vmand %vm244, %vm261
      %vm278 = vmand %vm245, %vm262
      %vm279 = vmand %vm246, %vm263
      %vm280 = vmand %vm247, %vm264
      %vm281 = vmand %vm248, %vm265
      %vm282 = vmand %vm249, %vm266
      %vm283 = vmand %vm250, %vm267
      %v284 = vld [vmem:[%s223] sm:$0xff]
      %v285 = vld [vmem:[%s223 + $0x8] sm:$0xff]
      %v286 = vld [vmem:[%s223 + $0x10] sm:$0xff]
      %v287 = vld [vmem:[%s223 + $0x18] sm:$0xff]
      %v288 = vld [vmem:[%s223 + $0x20] sm:$0xff]
      %v289 = vld [vmem:[%s223 + $0x28] sm:$0xff]
      %v290 = vld [vmem:[%s223 + $0x30] sm:$0xff]
      %v291 = vld [vmem:[%s223 + $0x38] sm:$0xff]
      %v292 = vld [vmem:[%s223 + $0x40] sm:$0xff]
      %v293 = vld [vmem:[%s223 + $0x48] sm:$0xff]
      %v294 = vld [vmem:[%s223 + $0x50] sm:$0xff]
      %v295 = vld [vmem:[%s223 + $0x58] sm:$0xff]
      %v296 = vld [vmem:[%s223 + $0x60] sm:$0xff]
      %v297 = vld [vmem:[%s223 + $0x68] sm:$0xff]
      %v298 = vld [vmem:[%s223 + $0x70] sm:$0xff]
      %v299 = vld [vmem:[%s223 + $0x78] sm:$0xff]
      %v300 = vld [vmem:[%s223 + $0x80] sm:$0xff]
      %v301 = vld [vmem:[%s223 + $0x88] sm:$0xff]
      %v302 = vld [vmem:[%s223 + $0x90] sm:$0xff]
      %v303 = vld [vmem:[%s223 + $0x98] sm:$0xff]
      %v304 = vld [vmem:[%s223 + $0xa0] sm:$0xff]
      %v305 = vld [vmem:[%s223 + $0xa8] sm:$0xff]
      %v306 = vld [vmem:[%s223 + $0xb0] sm:$0xff]
      %v307 = vld [vmem:[%s223 + $0xb8] sm:$0xff]
      %v308 = vld [vmem:[%s223 + $0xc0] sm:$0xff]
      %v309 = vld [vmem:[%s223 + $0xc8] sm:$0xff]
      %v310 = vld [vmem:[%s223 + $0xd0] sm:$0xff]
      %v311 = vld [vmem:[%s223 + $0xd8] sm:$0xff]
      %v312 = vld [vmem:[%s223 + $0xe0] sm:$0xff]
      %v313 = vld [vmem:[%s223 + $0xe8] sm:$0xff]
      %v314 = vld [vmem:[%s223 + $0xf0] sm:$0xff]
      %v315 = vld [vmem:[%s223 + $0xf8] sm:$0xff]
      %v316 = vsel %vm268, 1, 0
      %v317 = vsel %vm269, 1, 0
      %v318 = vsel %vm270, 1, 0
      %v319 = vsel %vm271, 1, 0
      %v320 = vsel %vm272, 1, 0
      %v321 = vsel %vm273, 1, 0
      %v322 = vsel %vm274, 1, 0
      %v323 = vsel %vm275, 1, 0
      %v324 = vsel %vm276, 1, 0
      %v325 = vsel %vm277, 1, 0
      %v326 = vsel %vm278, 1, 0
      %v327 = vsel %vm279, 1, 0
      %v328 = vsel %vm280, 1, 0
      %v329 = vsel %vm281, 1, 0
      %v330 = vsel %vm282, 1, 0
      %v331 = vsel %vm283, 1, 0
      %vm332 = vcmp.eq.s32.totalorder %v316, 1
      %vm333 = vcmp.eq.s32.totalorder %v317, 1
      %vm334 = vcmp.eq.s32.totalorder %v318, 1
      %vm335 = vcmp.eq.s32.totalorder %v319, 1
      %vm336 = vcmp.eq.s32.totalorder %v320, 1
      %vm337 = vcmp.eq.s32.totalorder %v321, 1
      %vm338 = vcmp.eq.s32.totalorder %v322, 1
      %vm339 = vcmp.eq.s32.totalorder %v323, 1
      %vm340 = vcmp.eq.s32.totalorder %v324, 1
      %vm341 = vcmp.eq.s32.totalorder %v325, 1
      %vm342 = vcmp.eq.s32.totalorder %v326, 1
      %vm343 = vcmp.eq.s32.totalorder %v327, 1
      %vm344 = vcmp.eq.s32.totalorder %v328, 1
      %vm345 = vcmp.eq.s32.totalorder %v329, 1
      %vm346 = vcmp.eq.s32.totalorder %v330, 1
      %vm347 = vcmp.eq.s32.totalorder %v331, 1
      %v348 = vsel %vm332, %v284, -inf
      %v349 = vsel %vm332, %v285, -inf
      %v350 = vsel %vm333, %v286, -inf
      %v351 = vsel %vm333, %v287, -inf
      %v352 = vsel %vm334, %v288, -inf
      %v353 = vsel %vm334, %v289, -inf
      %v354 = vsel %vm335, %v290, -inf
      %v355 = vsel %vm335, %v291, -inf
      %v356 = vsel %vm336, %v292, -inf
      %v357 = vsel %vm336, %v293, -inf
      %v358 = vsel %vm337, %v294, -inf
      %v359 = vsel %vm337, %v295, -inf
      %v360 = vsel %vm338, %v296, -inf
      %v361 = vsel %vm338, %v297, -inf
      %v362 = vsel %vm339, %v298, -inf
      %v363 = vsel %vm339, %v299, -inf
      %v364 = vsel %vm340, %v300, -inf
      %v365 = vsel %vm340, %v301, -inf
      %v366 = vsel %vm341, %v302, -inf
      %v367 = vsel %vm341, %v303, -inf
      %v368 = vsel %vm342, %v304, -inf
      %v369 = vsel %vm342, %v305, -inf
      %v370 = vsel %vm343, %v306, -inf
      %v371 = vsel %vm343, %v307, -inf
      %v372 = vsel %vm344, %v308, -inf
      %v373 = vsel %vm344, %v309, -inf
      %v374 = vsel %vm345, %v310, -inf
      %v375 = vsel %vm345, %v311, -inf
      %v376 = vsel %vm346, %v312, -inf
      %v377 = vsel %vm346, %v313, -inf
      %v378 = vsel %vm347, %v314, -inf
      %v379 = vsel %vm347, %v315, -inf
      %vm380 = vcmask 31744
      %v381 = vsel %vm380, %v348, -inf
      %v382 = vsel %vm380, %v350, -inf
      %v383 = vsel %vm380, %v352, -inf
      %v384 = vmax.f32 %v381, %v383
      %v385 = vsel %vm380, %v354, -inf
      %v386 = vmax.f32 %v382, %v385
      %v387 = vsel %vm380, %v356, -inf
      %v388 = vmax.f32 %v384, %v387
      %v389 = vsel %vm380, %v358, -inf
      %v390 = vmax.f32 %v386, %v389
      %v391 = vsel %vm380, %v360, -inf
      %v392 = vmax.f32 %v388, %v391
      %v393 = vsel %vm380, %v362, -inf
      %v394 = vmax.f32 %v390, %v393
      %v395 = vsel %vm380, %v364, -inf
      %v396 = vmax.f32 %v392, %v395
      %v397 = vsel %vm380, %v366, -inf
      %v398 = vmax.f32 %v394, %v397
      %v399 = vsel %vm380, %v368, -inf
      %v400 = vmax.f32 %v396, %v399
      %v401 = vsel %vm380, %v370, -inf
      %v402 = vmax.f32 %v398, %v401
      %v403 = vsel %vm380, %v372, -inf
      %v404 = vmax.f32 %v400, %v403
      %v405 = vsel %vm380, %v374, -inf
      %v406 = vmax.f32 %v402, %v405
      %v407 = vsel %vm380, %v376, -inf
      %v408 = vmax.f32 %v404, %v407
      %v409 = vsel %vm380, %v378, -inf
      %v410 = vmax.f32 %v406, %v409
      %v411 = vmax.f32 %v408, %v410
      %v412 = vsel %vm380, %v349, -inf
      %v413 = vsel %vm380, %v351, -inf
      %v414 = vsel %vm380, %v353, -inf
      %v415 = vmax.f32 %v412, %v414
      %v416 = vsel %vm380, %v355, -inf
      %v417 = vmax.f32 %v413, %v416
      %v418 = vsel %vm380, %v357, -inf
      %v419 = vmax.f32 %v415, %v418
      %v420 = vsel %vm380, %v359, -inf
      %v421 = vmax.f32 %v417, %v420
      %v422 = vsel %vm380, %v361, -inf
      %v423 = vmax.f32 %v419, %v422
      %v424 = vsel %vm380, %v363, -inf
      %v425 = vmax.f32 %v421, %v424
      %v426 = vsel %vm380, %v365, -inf
      %v427 = vmax.f32 %v423, %v426
      %v428 = vsel %vm380, %v367, -inf
      %v429 = vmax.f32 %v425, %v428
      %v430 = vsel %vm380, %v369, -inf
      %v431 = vmax.f32 %v427, %v430
      %v432 = vsel %vm380, %v371, -inf
      %v433 = vmax.f32 %v429, %v432
      %v434 = vsel %vm380, %v373, -inf
      %v435 = vmax.f32 %v431, %v434
      %v436 = vsel %vm380, %v375, -inf
      %v437 = vmax.f32 %v433, %v436
      %v438 = vsel %vm380, %v377, -inf
      %v439 = vmax.f32 %v435, %v438
      %v440 = vsel %vm380, %v379, -inf
      %v441 = vmax.f32 %v437, %v440
      %v442 = vmax.f32 %v439, %v441
      %443 = vst.msk [vmem:[#allocation2] sm:$0xff] %vm380, %v411
      %444 = vst.msk [vmem:[#allocation2 + $0x8] sm:$0xff] %vm380, %v442
      %s445 = sadd.s32 %s230, 1
      %s446 = sld [smem:[#allocation5 + %s445]]
      %s447 = sadd.s32 %s230, 4
      %s448 = sld [smem:[#allocation5 + %s447]]
      %v449 = vstv %s446
      %vm450 = vcmp.le.s32.totalorder %v449, 0
      %vm451 = vcmp.le.s32.totalorder %v449, 1
      %vm452 = vcmp.le.s32.totalorder %v449, 2
      %vm453 = vcmp.le.s32.totalorder %v449, 3
      %vm454 = vcmp.le.s32.totalorder %v449, 4
      %vm455 = vcmp.le.s32.totalorder %v449, 5
      %vm456 = vcmp.le.s32.totalorder %v449, 6
      %vm457 = vcmp.le.s32.totalorder %v449, 7
      %vm458 = vcmp.le.s32.totalorder %v449, 8
      %vm459 = vcmp.le.s32.totalorder %v449, 9
      %vm460 = vcmp.le.s32.totalorder %v449, 10
      %vm461 = vcmp.le.s32.totalorder %v449, 11
      %vm462 = vcmp.le.s32.totalorder %v449, 12
      %vm463 = vcmp.le.s32.totalorder %v449, 13
      %vm464 = vcmp.le.s32.totalorder %v449, 14
      %vm465 = vcmp.le.s32.totalorder %v449, 15
      %v466 = vstv %s448
      %vm467 = vcmp.gt.s32.totalorder %v466, 0
      %vm468 = vcmp.gt.s32.totalorder %v466, 1
      %vm469 = vcmp.gt.s32.totalorder %v466, 2
      %vm470 = vcmp.gt.s32.totalorder %v466, 3
      %vm471 = vcmp.gt.s32.totalorder %v466, 4
      %vm472 = vcmp.gt.s32.totalorder %v466, 5
      %vm473 = vcmp.gt.s32.totalorder %v466, 6
      %vm474 = vcmp.gt.s32.totalorder %v466, 7
      %vm475 = vcmp.gt.s32.totalorder %v466, 8
      %vm476 = vcmp.gt.s32.totalorder %v466, 9
      %vm477 = vcmp.gt.s32.totalorder %v466, 10
      %vm478 = vcmp.gt.s32.totalorder %v466, 11
      %vm479 = vcmp.gt.s32.totalorder %v466, 12
      %vm480 = vcmp.gt.s32.totalorder %v466, 13
      %vm481 = vcmp.gt.s32.totalorder %v466, 14
      %vm482 = vcmp.gt.s32.totalorder %v466, 15
      %vm483 = vmand %vm450, %vm467
      %vm484 = vmand %vm451, %vm468
      %vm485 = vmand %vm452, %vm469
      %vm486 = vmand %vm453, %vm470
      %vm487 = vmand %vm454, %vm471
      %vm488 = vmand %vm455, %vm472
      %vm489 = vmand %vm456, %vm473
      %vm490 = vmand %vm457, %vm474
      %vm491 = vmand %vm458, %vm475
      %vm492 = vmand %vm459, %vm476
      %vm493 = vmand %vm460, %vm477
      %vm494 = vmand %vm461, %vm478
      %vm495 = vmand %vm462, %vm479
      %vm496 = vmand %vm463, %vm480
      %vm497 = vmand %vm464, %vm481
      %vm498 = vmand %vm465, %vm482
      %v499 = vld [vmem:[%s223] sm:$0xff]
      %v500 = vld [vmem:[%s223 + $0x8] sm:$0xff]
      %v501 = vld [vmem:[%s223 + $0x10] sm:$0xff]
      %v502 = vld [vmem:[%s223 + $0x18] sm:$0xff]
      %v503 = vld [vmem:[%s223 + $0x20] sm:$0xff]
      %v504 = vld [vmem:[%s223 + $0x28] sm:$0xff]
      %v505 = vld [vmem:[%s223 + $0x30] sm:$0xff]
      %v506 = vld [vmem:[%s223 + $0x38] sm:$0xff]
      %v507 = vld [vmem:[%s223 + $0x40] sm:$0xff]
      %v508 = vld [vmem:[%s223 + $0x48] sm:$0xff]
      %v509 = vld [vmem:[%s223 + $0x50] sm:$0xff]
      %v510 = vld [vmem:[%s223 + $0x58] sm:$0xff]
      %v511 = vld [vmem:[%s223 + $0x60] sm:$0xff]
      %v512 = vld [vmem:[%s223 + $0x68] sm:$0xff]
      %v513 = vld [vmem:[%s223 + $0x70] sm:$0xff]
      %v514 = vld [vmem:[%s223 + $0x78] sm:$0xff]
      %v515 = vld [vmem:[%s223 + $0x80] sm:$0xff]
      %v516 = vld [vmem:[%s223 + $0x88] sm:$0xff]
      %v517 = vld [vmem:[%s223 + $0x90] sm:$0xff]
      %v518 = vld [vmem:[%s223 + $0x98] sm:$0xff]
      %v519 = vld [vmem:[%s223 + $0xa0] sm:$0xff]
      %v520 = vld [vmem:[%s223 + $0xa8] sm:$0xff]
      %v521 = vld [vmem:[%s223 + $0xb0] sm:$0xff]
      %v522 = vld [vmem:[%s223 + $0xb8] sm:$0xff]
      %v523 = vld [vmem:[%s223 + $0xc0] sm:$0xff]
      %v524 = vld [vmem:[%s223 + $0xc8] sm:$0xff]
      %v525 = vld [vmem:[%s223 + $0xd0] sm:$0xff]
      %v526 = vld [vmem:[%s223 + $0xd8] sm:$0xff]
      %v527 = vld [vmem:[%s223 + $0xe0] sm:$0xff]
      %v528 = vld [vmem:[%s223 + $0xe8] sm:$0xff]
      %v529 = vld [vmem:[%s223 + $0xf0] sm:$0xff]
      %v530 = vld [vmem:[%s223 + $0xf8] sm:$0xff]
      %v531 = vsel %vm483, 1, 0
      %v532 = vsel %vm484, 1, 0
      %v533 = vsel %vm485, 1, 0
      %v534 = vsel %vm486, 1, 0
      %v535 = vsel %vm487, 1, 0
      %v536 = vsel %vm488, 1, 0
      %v537 = vsel %vm489, 1, 0
      %v538 = vsel %vm490, 1, 0
      %v539 = vsel %vm491, 1, 0
      %v540 = vsel %vm492, 1, 0
      %v541 = vsel %vm493, 1, 0
      %v542 = vsel %vm494, 1, 0
      %v543 = vsel %vm495, 1, 0
      %v544 = vsel %vm496, 1, 0
      %v545 = vsel %vm497, 1, 0
      %v546 = vsel %vm498, 1, 0
      %vm547 = vcmp.eq.s32.totalorder %v531, 1
      %vm548 = vcmp.eq.s32.totalorder %v532, 1
      %vm549 = vcmp.eq.s32.totalorder %v533, 1
      %vm550 = vcmp.eq.s32.totalorder %v534, 1
      %vm551 = vcmp.eq.s32.totalorder %v535, 1
      %vm552 = vcmp.eq.s32.totalorder %v536, 1
      %vm553 = vcmp.eq.s32.totalorder %v537, 1
      %vm554 = vcmp.eq.s32.totalorder %v538, 1
      %vm555 = vcmp.eq.s32.totalorder %v539, 1
      %vm556 = vcmp.eq.s32.totalorder %v540, 1
      %vm557 = vcmp.eq.s32.totalorder %v541, 1
      %vm558 = vcmp.eq.s32.totalorder %v542, 1
      %vm559 = vcmp.eq.s32.totalorder %v543, 1
      %vm560 = vcmp.eq.s32.totalorder %v544, 1
      %vm561 = vcmp.eq.s32.totalorder %v545, 1
      %vm562 = vcmp.eq.s32.totalorder %v546, 1
      %v563 = vsel %vm547, %v499, -inf
      %v564 = vsel %vm547, %v500, -inf
      %v565 = vsel %vm548, %v501, -inf
      %v566 = vsel %vm548, %v502, -inf
      %v567 = vsel %vm549, %v503, -inf
      %v568 = vsel %vm549, %v504, -inf
      %v569 = vsel %vm550, %v505, -inf
      %v570 = vsel %vm550, %v506, -inf
      %v571 = vsel %vm551, %v507, -inf
      %v572 = vsel %vm551, %v508, -inf
      %v573 = vsel %vm552, %v509, -inf
      %v574 = vsel %vm552, %v510, -inf
      %v575 = vsel %vm553, %v511, -inf
      %v576 = vsel %vm553, %v512, -inf
      %v577 = vsel %vm554, %v513, -inf
      %v578 = vsel %vm554, %v514, -inf
      %v579 = vsel %vm555, %v515, -inf
      %v580 = vsel %vm555, %v516, -inf
      %v581 = vsel %vm556, %v517, -inf
      %v582 = vsel %vm556, %v518, -inf
      %v583 = vsel %vm557, %v519, -inf
      %v584 = vsel %vm557, %v520, -inf
      %v585 = vsel %vm558, %v521, -inf
      %v586 = vsel %vm558, %v522, -inf
      %v587 = vsel %vm559, %v523, -inf
      %v588 = vsel %vm559, %v524, -inf
      %v589 = vsel %vm560, %v525, -inf
      %v590 = vsel %vm560, %v526, -inf
      %v591 = vsel %vm561, %v527, -inf
      %v592 = vsel %vm561, %v528, -inf
      %v593 = vsel %vm562, %v529, -inf
      %v594 = vsel %vm562, %v530, -inf
      %v595 = vsel %vm380, %v563, -inf
      %v596 = vsel %vm380, %v565, -inf
      %v597 = vsel %vm380, %v567, -inf
      %v598 = vmax.f32 %v595, %v597
      %v599 = vsel %vm380, %v569, -inf
      %v600 = vmax.f32 %v596, %v599
      %v601 = vsel %vm380, %v571, -inf
      %v602 = vmax.f32 %v598, %v601
      %v603 = vsel %vm380, %v573, -inf
      %v604 = vmax.f32 %v600, %v603
      %v605 = vsel %vm380, %v575, -inf
      %v606 = vmax.f32 %v602, %v605
      %v607 = vsel %vm380, %v577, -inf
      %v608 = vmax.f32 %v604, %v607
      %v609 = vsel %vm380, %v579, -inf
      %v610 = vmax.f32 %v606, %v609
      %v611 = vsel %vm380, %v581, -inf
      %v612 = vmax.f32 %v608, %v611
      %v613 = vsel %vm380, %v583, -inf
      %v614 = vmax.f32 %v610, %v613
      %v615 = vsel %vm380, %v585, -inf
      %v616 = vmax.f32 %v612, %v615
      %v617 = vsel %vm380, %v587, -inf
      %v618 = vmax.f32 %v614, %v617
      %v619 = vsel %vm380, %v589, -inf
      %v620 = vmax.f32 %v616, %v619
      %v621 = vsel %vm380, %v591, -inf
      %v622 = vmax.f32 %v618, %v621
      %v623 = vsel %vm380, %v593, -inf
      %v624 = vmax.f32 %v620, %v623
      %v625 = vmax.f32 %v622, %v624
      %v626 = vsel %vm380, %v564, -inf
      %v627 = vsel %vm380, %v566, -inf
      %v628 = vsel %vm380, %v568, -inf
      %v629 = vmax.f32 %v626, %v628
      %v630 = vsel %vm380, %v570, -inf
      %v631 = vmax.f32 %v627, %v630
      %v632 = vsel %vm380, %v572, -inf
      %v633 = vmax.f32 %v629, %v632
      %v634 = vsel %vm380, %v574, -inf
      %v635 = vmax.f32 %v631, %v634
      %v636 = vsel %vm380, %v576, -inf
      %v637 = vmax.f32 %v633, %v636
      %v638 = vsel %vm380, %v578, -inf
      %v639 = vmax.f32 %v635, %v638
      %v640 = vsel %vm380, %v580, -inf
      %v641 = vmax.f32 %v637, %v640
      %v642 = vsel %vm380, %v582, -inf
      %v643 = vmax.f32 %v639, %v642
      %v644 = vsel %vm380, %v584, -inf
      %v645 = vmax.f32 %v641, %v644
      %v646 = vsel %vm380, %v586, -inf
      %v647 = vmax.f32 %v643, %v646
      %v648 = vsel %vm380, %v588, -inf
      %v649 = vmax.f32 %v645, %v648
      %v650 = vsel %vm380, %v590, -inf
      %v651 = vmax.f32 %v647, %v650
      %v652 = vsel %vm380, %v592, -inf
      %v653 = vmax.f32 %v649, %v652
      %v654 = vsel %vm380, %v594, -inf
      %v655 = vmax.f32 %v651, %v654
      %v656 = vmax.f32 %v653, %v655
      %s657 = scalar_lea.vmem [#allocation2], 16
      %658 = vst.msk [vmem:[%s657] sm:$0xff] %vm380, %v625
      %659 = vst.msk [vmem:[%s657 + $0x8] sm:$0xff] %vm380, %v656
      %s660 = sadd.s32 %s230, 2
      %s661 = sld [smem:[#allocation5 + %s660]]
      %s662 = sadd.s32 %s230, 5
      %s663 = sld [smem:[#allocation5 + %s662]]
      %v664 = vstv %s661
      %vm665 = vcmp.le.s32.totalorder %v664, 0
      %vm666 = vcmp.le.s32.totalorder %v664, 1
      %vm667 = vcmp.le.s32.totalorder %v664, 2
      %vm668 = vcmp.le.s32.totalorder %v664, 3
      %vm669 = vcmp.le.s32.totalorder %v664, 4
      %vm670 = vcmp.le.s32.totalorder %v664, 5
      %vm671 = vcmp.le.s32.totalorder %v664, 6
      %vm672 = vcmp.le.s32.totalorder %v664, 7
      %vm673 = vcmp.le.s32.totalorder %v664, 8
      %vm674 = vcmp.le.s32.totalorder %v664, 9
      %vm675 = vcmp.le.s32.totalorder %v664, 10
      %vm676 = vcmp.le.s32.totalorder %v664, 11
      %vm677 = vcmp.le.s32.totalorder %v664, 12
      %vm678 = vcmp.le.s32.totalorder %v664, 13
      %vm679 = vcmp.le.s32.totalorder %v664, 14
      %vm680 = vcmp.le.s32.totalorder %v664, 15
      %v681 = vstv %s663
      %vm682 = vcmp.gt.s32.totalorder %v681, 0
      %vm683 = vcmp.gt.s32.totalorder %v681, 1
      %vm684 = vcmp.gt.s32.totalorder %v681, 2
      %vm685 = vcmp.gt.s32.totalorder %v681, 3
      %vm686 = vcmp.gt.s32.totalorder %v681, 4
      %vm687 = vcmp.gt.s32.totalorder %v681, 5
      %vm688 = vcmp.gt.s32.totalorder %v681, 6
      %vm689 = vcmp.gt.s32.totalorder %v681, 7
      %vm690 = vcmp.gt.s32.totalorder %v681, 8
      %vm691 = vcmp.gt.s32.totalorder %v681, 9
      %vm692 = vcmp.gt.s32.totalorder %v681, 10
      %vm693 = vcmp.gt.s32.totalorder %v681, 11
      %vm694 = vcmp.gt.s32.totalorder %v681, 12
      %vm695 = vcmp.gt.s32.totalorder %v681, 13
      %vm696 = vcmp.gt.s32.totalorder %v681, 14
      %vm697 = vcmp.gt.s32.totalorder %v681, 15
      %vm698 = vmand %vm665, %vm682
      %vm699 = vmand %vm666, %vm683
      %vm700 = vmand %vm667, %vm684
      %vm701 = vmand %vm668, %vm685
      %vm702 = vmand %vm669, %vm686
      %vm703 = vmand %vm670, %vm687
      %vm704 = vmand %vm671, %vm688
      %vm705 = vmand %vm672, %vm689
      %vm706 = vmand %vm673, %vm690
      %vm707 = vmand %vm674, %vm691
      %vm708 = vmand %vm675, %vm692
      %vm709 = vmand %vm676, %vm693
      %vm710 = vmand %vm677, %vm694
      %vm711 = vmand %vm678, %vm695
      %vm712 = vmand %vm679, %vm696
      %vm713 = vmand %vm680, %vm697
      %v714 = vld [vmem:[%s223] sm:$0xff]
      %v715 = vld [vmem:[%s223 + $0x8] sm:$0xff]
      %v716 = vld [vmem:[%s223 + $0x10] sm:$0xff]
      %v717 = vld [vmem:[%s223 + $0x18] sm:$0xff]
      %v718 = vld [vmem:[%s223 + $0x20] sm:$0xff]
      %v719 = vld [vmem:[%s223 + $0x28] sm:$0xff]
      %v720 = vld [vmem:[%s223 + $0x30] sm:$0xff]
      %v721 = vld [vmem:[%s223 + $0x38] sm:$0xff]
      %v722 = vld [vmem:[%s223 + $0x40] sm:$0xff]
      %v723 = vld [vmem:[%s223 + $0x48] sm:$0xff]
      %v724 = vld [vmem:[%s223 + $0x50] sm:$0xff]
      %v725 = vld [vmem:[%s223 + $0x58] sm:$0xff]
      %v726 = vld [vmem:[%s223 + $0x60] sm:$0xff]
      %v727 = vld [vmem:[%s223 + $0x68] sm:$0xff]
      %v728 = vld [vmem:[%s223 + $0x70] sm:$0xff]
      %v729 = vld [vmem:[%s223 + $0x78] sm:$0xff]
      %v730 = vld [vmem:[%s223 + $0x80] sm:$0xff]
      %v731 = vld [vmem:[%s223 + $0x88] sm:$0xff]
      %v732 = vld [vmem:[%s223 + $0x90] sm:$0xff]
      %v733 = vld [vmem:[%s223 + $0x98] sm:$0xff]
      %v734 = vld [vmem:[%s223 + $0xa0] sm:$0xff]
      %v735 = vld [vmem:[%s223 + $0xa8] sm:$0xff]
      %v736 = vld [vmem:[%s223 + $0xb0] sm:$0xff]
      %v737 = vld [vmem:[%s223 + $0xb8] sm:$0xff]
      %v738 = vld [vmem:[%s223 + $0xc0] sm:$0xff]
      %v739 = vld [vmem:[%s223 + $0xc8] sm:$0xff]
      %v740 = vld [vmem:[%s223 + $0xd0] sm:$0xff]
      %v741 = vld [vmem:[%s223 + $0xd8] sm:$0xff]
      %v742 = vld [vmem:[%s223 + $0xe0] sm:$0xff]
      %v743 = vld [vmem:[%s223 + $0xe8] sm:$0xff]
      %v744 = vld [vmem:[%s223 + $0xf0] sm:$0xff]
      %v745 = vld [vmem:[%s223 + $0xf8] sm:$0xff]
      %v746 = vsel %vm698, 1, 0
      %v747 = vsel %vm699, 1, 0
      %v748 = vsel %vm700, 1, 0
      %v749 = vsel %vm701, 1, 0
      %v750 = vsel %vm702, 1, 0
      %v751 = vsel %vm703, 1, 0
      %v752 = vsel %vm704, 1, 0
      %v753 = vsel %vm705, 1, 0
      %v754 = vsel %vm706, 1, 0
      %v755 = vsel %vm707, 1, 0
      %v756 = vsel %vm708, 1, 0
      %v757 = vsel %vm709, 1, 0
      %v758 = vsel %vm710, 1, 0
      %v759 = vsel %vm711, 1, 0
      %v760 = vsel %vm712, 1, 0
      %v761 = vsel %vm713, 1, 0
      %vm762 = vcmp.eq.s32.totalorder %v746, 1
      %vm763 = vcmp.eq.s32.totalorder %v747, 1
      %vm764 = vcmp.eq.s32.totalorder %v748, 1
      %vm765 = vcmp.eq.s32.totalorder %v749, 1
      %vm766 = vcmp.eq.s32.totalorder %v750, 1
      %vm767 = vcmp.eq.s32.totalorder %v751, 1
      %vm768 = vcmp.eq.s32.totalorder %v752, 1
      %vm769 = vcmp.eq.s32.totalorder %v753, 1
      %vm770 = vcmp.eq.s32.totalorder %v754, 1
      %vm771 = vcmp.eq.s32.totalorder %v755, 1
      %vm772 = vcmp.eq.s32.totalorder %v756, 1
      %vm773 = vcmp.eq.s32.totalorder %v757, 1
      %vm774 = vcmp.eq.s32.totalorder %v758, 1
      %vm775 = vcmp.eq.s32.totalorder %v759, 1
      %vm776 = vcmp.eq.s32.totalorder %v760, 1
      %vm777 = vcmp.eq.s32.totalorder %v761, 1
      %v778 = vsel %vm762, %v714, -inf
      %v779 = vsel %vm762, %v715, -inf
      %v780 = vsel %vm763, %v716, -inf
      %v781 = vsel %vm763, %v717, -inf
      %v782 = vsel %vm764, %v718, -inf
      %v783 = vsel %vm764, %v719, -inf
      %v784 = vsel %vm765, %v720, -inf
      %v785 = vsel %vm765, %v721, -inf
      %v786 = vsel %vm766, %v722, -inf
      %v787 = vsel %vm766, %v723, -inf
      %v788 = vsel %vm767, %v724, -inf
      %v789 = vsel %vm767, %v725, -inf
      %v790 = vsel %vm768, %v726, -inf
      %v791 = vsel %vm768, %v727, -inf
      %v792 = vsel %vm769, %v728, -inf
      %v793 = vsel %vm769, %v729, -inf
      %v794 = vsel %vm770, %v730, -inf
      %v795 = vsel %vm770, %v731, -inf
      %v796 = vsel %vm771, %v732, -inf
      %v797 = vsel %vm771, %v733, -inf
      %v798 = vsel %vm772, %v734, -inf
      %v799 = vsel %vm772, %v735, -inf
      %v800 = vsel %vm773, %v736, -inf
      %v801 = vsel %vm773, %v737, -inf
      %v802 = vsel %vm774, %v738, -inf
      %v803 = vsel %vm774, %v739, -inf
      %v804 = vsel %vm775, %v740, -inf
      %v805 = vsel %vm775, %v741, -inf
      %v806 = vsel %vm776, %v742, -inf
      %v807 = vsel %vm776, %v743, -inf
      %v808 = vsel %vm777, %v744, -inf
      %v809 = vsel %vm777, %v745, -inf
      %v810 = vsel %vm380, %v778, -inf
      %v811 = vsel %vm380, %v780, -inf
      %v812 = vsel %vm380, %v782, -inf
      %v813 = vmax.f32 %v810, %v812
      %v814 = vsel %vm380, %v784, -inf
      %v815 = vmax.f32 %v811, %v814
      %v816 = vsel %vm380, %v786, -inf
      %v817 = vmax.f32 %v813, %v816
      %v818 = vsel %vm380, %v788, -inf
      %v819 = vmax.f32 %v815, %v818
      %v820 = vsel %vm380, %v790, -inf
      %v821 = vmax.f32 %v817, %v820
      %v822 = vsel %vm380, %v792, -inf
      %v823 = vmax.f32 %v819, %v822
      %v824 = vsel %vm380, %v794, -inf
      %v825 = vmax.f32 %v821, %v824
      %v826 = vsel %vm380, %v796, -inf
      %v827 = vmax.f32 %v823, %v826
      %v828 = vsel %vm380, %v798, -inf
      %v829 = vmax.f32 %v825, %v828
      %v830 = vsel %vm380, %v800, -inf
      %v831 = vmax.f32 %v827, %v830
      %v832 = vsel %vm380, %v802, -inf
      %v833 = vmax.f32 %v829, %v832
      %v834 = vsel %vm380, %v804, -inf
      %v835 = vmax.f32 %v831, %v834
      %v836 = vsel %vm380, %v806, -inf
      %v837 = vmax.f32 %v833, %v836
      %v838 = vsel %vm380, %v808, -inf
      %v839 = vmax.f32 %v835, %v838
      %v840 = vmax.f32 %v837, %v839
      %v841 = vsel %vm380, %v779, -inf
      %v842 = vsel %vm380, %v781, -inf
      %v843 = vsel %vm380, %v783, -inf
      %v844 = vmax.f32 %v841, %v843
      %v845 = vsel %vm380, %v785, -inf
      %v846 = vmax.f32 %v842, %v845
      %v847 = vsel %vm380, %v787, -inf
      %v848 = vmax.f32 %v844, %v847
      %v849 = vsel %vm380, %v789, -inf
      %v850 = vmax.f32 %v846, %v849
      %v851 = vsel %vm380, %v791, -inf
      %v852 = vmax.f32 %v848, %v851
      %v853 = vsel %vm380, %v793, -inf
      %v854 = vmax.f32 %v850, %v853
      %v855 = vsel %vm380, %v795, -inf
      %v856 = vmax.f32 %v852, %v855
      %v857 = vsel %vm380, %v797, -inf
      %v858 = vmax.f32 %v854, %v857
      %v859 = vsel %vm380, %v799, -inf
      %v860 = vmax.f32 %v856, %v859
      %v861 = vsel %vm380, %v801, -inf
      %v862 = vmax.f32 %v858, %v861
      %v863 = vsel %vm380, %v803, -inf
      %v864 = vmax.f32 %v860, %v863
      %v865 = vsel %vm380, %v805, -inf
      %v866 = vmax.f32 %v862, %v865
      %v867 = vsel %vm380, %v807, -inf
      %v868 = vmax.f32 %v864, %v867
      %v869 = vsel %vm380, %v809, -inf
      %v870 = vmax.f32 %v866, %v869
      %v871 = vmax.f32 %v868, %v870
      %s872 = scalar_lea.vmem [#allocation2], 32
      %873 = vst.msk [vmem:[%s872] sm:$0xff] %vm380, %v840
      %874 = vst.msk [vmem:[%s872 + $0x8] sm:$0xff] %vm380, %v871
      %v875 = vld [vmem:[%s212] sm:$0xff]
      %v876 = vld [vmem:[%s212 + $0x8] sm:$0xff]
      %v877 = vld [vmem:[%s212 + $0x10] sm:$0xff]
      %v878 = vld [vmem:[%s212 + $0x18] sm:$0xff]
      %v879 = vld [vmem:[%s212 + $0x20] sm:$0xff]
      %v880 = vld [vmem:[%s212 + $0x28] sm:$0xff]
      %v881 = vld [vmem:[#allocation2] sm:$0xff]
      %v882 = vld [vmem:[#allocation2 + $0x8] sm:$0xff]
      %vm883 = vcmp.gt.f32.partialorder %v875, 0.0
      %vm884 = vcmp.gt.f32.partialorder %v876, 0.0
      %vm885 = vcmp.gt.f32.partialorder %v877, 0.0
      %vm886 = vcmp.gt.f32.partialorder %v878, 0.0
      %vm887 = vcmp.gt.f32.partialorder %v879, 0.0
      %vm888 = vcmp.gt.f32.partialorder %v880, 0.0
      %v889 = vsel %vm883, 1, 0
      %v890 = vsel %vm884, 1, 0
      %v891 = vsel %vm885, 1, 0
      %v892 = vsel %vm886, 1, 0
      %v893 = vsel %vm887, 1, 0
      %v894 = vsel %vm888, 1, 0
      %895 = vset.pattern.permute.xlu0 0
      %896 = vperm.xlu0 %895, %v889
      %v897 = vpop.permute.xlu0 %896
      %898 = vset.pattern.permute.xlu0 0
      %899 = vperm.xlu0 %898, %v890
      %v900 = vpop.permute.xlu0 %899
      %901 = vset.pattern.permute.xlu0 0
      %902 = vperm.xlu0 %901, %v891
      %v903 = vpop.permute.xlu0 %902
      %904 = vset.pattern.permute.xlu0 0
      %905 = vperm.xlu0 %904, %v892
      %v906 = vpop.permute.xlu0 %905
      %907 = vset.pattern.permute.xlu0 0
      %908 = vperm.xlu0 %907, %v893
      %v909 = vpop.permute.xlu0 %908
      %910 = vset.pattern.permute.xlu0 0
      %911 = vperm.xlu0 %910, %v894
      %v912 = vpop.permute.xlu0 %911
      %vm913 = vcmp.eq.s32.totalorder %v897, 1
      %vm914 = vcmp.eq.s32.totalorder %v900, 1
      %vm915 = vcmp.eq.s32.totalorder %v903, 1
      %vm916 = vcmp.eq.s32.totalorder %v906, 1
      %vm917 = vcmp.eq.s32.totalorder %v909, 1
      %vm918 = vcmp.eq.s32.totalorder %v912, 1
      %v919 = vsel %vm913, %v881, -inf
      %v920 = vsel %vm914, %v882, -inf
      %v921 = vsel %vm915, %v881, -inf
      %v922 = vsel %vm916, %v882, -inf
      %v923 = vsel %vm917, %v881, -inf
      %v924 = vsel %vm918, %v882, -inf
      %v925 = vsel %vm380, %v919, -inf
      %v926 = vsel %vm380, %v920, -inf
      %v927 = vmax.f32 %v925, %v926
      %v928 = vrot.slane %v927, 4
      %v929 = vmax.f32 %v927, %v928
      %v930 = vrot.slane %v929, 2
      %v931 = vmax.f32 %v929, %v930
      %v932 = vrot.slane %v931, 1
      %v933 = vmax.f32 %v931, %v932
      %v934 = vsel %vm380, %v921, -inf
      %v935 = vsel %vm380, %v922, -inf
      %v936 = vmax.f32 %v934, %v935
      %v937 = vrot.slane %v936, 4
      %v938 = vmax.f32 %v936, %v937
      %v939 = vrot.slane %v938, 2
      %v940 = vmax.f32 %v938, %v939
      %v941 = vrot.slane %v940, 1
      %v942 = vmax.f32 %v940, %v941
      %v943 = vsel %vm380, %v923, -inf
      %v944 = vsel %vm380, %v924, -inf
      %v945 = vmax.f32 %v943, %v944
      %v946 = vrot.slane %v945, 4
      %v947 = vmax.f32 %v945, %v946
      %v948 = vrot.slane %v947, 2
      %v949 = vmax.f32 %v947, %v948
      %v950 = vrot.slane %v949, 1
      %v951 = vmax.f32 %v949, %v950
      %v952 = vld [vmem:[%s217] sm:$0x7]
      %vm953 = vcmp.gt.f32.partialorder %v952, 0.0
      %v954 = vsel %vm953, 1, 0
      %955 = vset.pattern.permute.xlu0 0
      %956 = vperm.xlu0 %955, %v954
      %v957 = vpop.permute.xlu0 %956
      %vm958 = vcmp.eq.s32.totalorder %v957, 1
      %vm962 = vcmask 1041409
      %v963 = vsel %vm962, %v942, %v933
      %vm964 = vcmask 1042434
      %v965 = vsel %vm964, %v951, %v963
      %v967 = vsel %vm958, %v965, 0.0
      %vm968 = vcmask 26624
      %969 = vst.msk [vmem:[%s229] sm:$0x7] %vm968, %v967
      %v970 = vld [vmem:[%s657] sm:$0xff]
      %v971 = vld [vmem:[%s657 + $0x8] sm:$0xff]
      %v972 = vsel %vm913, %v970, -inf
      %v973 = vsel %vm914, %v971, -inf
      %v974 = vsel %vm915, %v970, -inf
      %v975 = vsel %vm916, %v971, -inf
      %v976 = vsel %vm917, %v970, -inf
      %v977 = vsel %vm918, %v971, -inf
      %v978 = vsel %vm380, %v972, -inf
      %v979 = vsel %vm380, %v973, -inf
      %v980 = vmax.f32 %v978, %v979
      %v981 = vrot.slane %v980, 4
      %v982 = vmax.f32 %v980, %v981
      %v983 = vrot.slane %v982, 2
      %v984 = vmax.f32 %v982, %v983
      %v985 = vrot.slane %v984, 1
      %v986 = vmax.f32 %v984, %v985
      %v987 = vsel %vm380, %v974, -inf
      %v988 = vsel %vm380, %v975, -inf
      %v989 = vmax.f32 %v987, %v988
      %v990 = vrot.slane %v989, 4
      %v991 = vmax.f32 %v989, %v990
      %v992 = vrot.slane %v991, 2
      %v993 = vmax.f32 %v991, %v992
      %v994 = vrot.slane %v993, 1
      %v995 = vmax.f32 %v993, %v994
      %v996 = vsel %vm380, %v976, -inf
      %v997 = vsel %vm380, %v977, -inf
      %v998 = vmax.f32 %v996, %v997
      %v999 = vrot.slane %v998, 4
      %v1000 = vmax.f32 %v998, %v999
      %v1001 = vrot.slane %v1000, 2
      %v1002 = vmax.f32 %v1000, %v1001
      %v1003 = vrot.slane %v1002, 1
      %v1004 = vmax.f32 %v1002, %v1003
      %v1005 = vld [vmem:[%s217 + $0x3] sm:$0x7]
      %vm1006 = vcmp.gt.f32.partialorder %v1005, 0.0
      %v1007 = vsel %vm1006, 1, 0
      %1008 = vset.pattern.permute.xlu0 0
      %1009 = vperm.xlu0 %1008, %v1007
      %v1010 = vpop.permute.xlu0 %1009
      %vm1011 = vcmp.eq.s32.totalorder %v1010, 1
      %v1015 = vsel %vm962, %v995, %v986
      %v1016 = vsel %vm964, %v1004, %v1015
      %v1018 = vsel %vm1011, %v1016, 0.0
      %1019 = vst.msk [vmem:[%s229 + $0x3] sm:$0x7] %vm968, %v1018
      %v1020 = vld [vmem:[%s872] sm:$0xff]
      %v1021 = vld [vmem:[%s872 + $0x8] sm:$0xff]
      %v1022 = vsel %vm913, %v1020, -inf
      %v1023 = vsel %vm914, %v1021, -inf
      %v1024 = vsel %vm915, %v1020, -inf
      %v1025 = vsel %vm916, %v1021, -inf
      %v1026 = vsel %vm917, %v1020, -inf
      %v1027 = vsel %vm918, %v1021, -inf
      %v1028 = vsel %vm380, %v1022, -inf
      %v1029 = vsel %vm380, %v1023, -inf
      %v1030 = vmax.f32 %v1028, %v1029
      %v1031 = vrot.slane %v1030, 4
      %v1032 = vmax.f32 %v1030, %v1031
      %v1033 = vrot.slane %v1032, 2
      %v1034 = vmax.f32 %v1032, %v1033
      %v1035 = vrot.slane %v1034, 1
      %v1036 = vmax.f32 %v1034, %v1035
      %v1037 = vsel %vm380, %v1024, -inf
      %v1038 = vsel %vm380, %v1025, -inf
      %v1039 = vmax.f32 %v1037, %v1038
      %v1040 = vrot.slane %v1039, 4
      %v1041 = vmax.f32 %v1039, %v1040
      %v1042 = vrot.slane %v1041, 2
      %v1043 = vmax.f32 %v1041, %v1042
      %v1044 = vrot.slane %v1043, 1
      %v1045 = vmax.f32 %v1043, %v1044
      %v1046 = vsel %vm380, %v1026, -inf
      %v1047 = vsel %vm380, %v1027, -inf
      %v1048 = vmax.f32 %v1046, %v1047
      %v1049 = vrot.slane %v1048, 4
      %v1050 = vmax.f32 %v1048, %v1049
      %v1051 = vrot.slane %v1050, 2
      %v1052 = vmax.f32 %v1050, %v1051
      %v1053 = vrot.slane %v1052, 1
      %v1054 = vmax.f32 %v1052, %v1053
      %v1055 = vld [vmem:[%s217 + $0x6] sm:$0x7]
      %vm1056 = vcmp.gt.f32.partialorder %v1055, 0.0
      %v1057 = vsel %vm1056, 1, 0
      %1058 = vset.pattern.permute.xlu0 0
      %1059 = vperm.xlu0 %1058, %v1057
      %v1060 = vpop.permute.xlu0 %1059
      %vm1061 = vcmp.eq.s32.totalorder %v1060, 1
      %v1065 = vsel %vm962, %v1045, %v1036
      %v1066 = vsel %vm964, %v1054, %v1065
      %v1068 = vsel %vm1061, %v1066, 0.0
      %1069 = vst.msk [vmem:[%s229 + $0x6] sm:$0x7] %vm968, %v1068
      %p1070 = scmp.lt.s32.totalorder %s26, 4
      %s1071 = scalar_select %p1070, %s26, 4
      %s1072 = smul.addr %s1071, 2
      %s1073 = smul.addr %s1072, 8
      %s1074 = scalar_lea.vmem %s5, %s1073
      // Predicated region
      $region33: #{tpu_custom_call.1} parent=31 // pred_check
        %p1075 = pneg %p124
      $region34: #{tpu_custom_call.1} parent=31 // pred_check_branch
        %1077 = sbr.rel (%p1075) target = $region36
      $region35: #{tpu_custom_call.1} parent=31 // pred_region
        _
      $region36: #{tpu_custom_call.1} parent=31 // pred_fallthru
        _
    $region32: #{tpu_custom_call.1} parent=5 // pred_fallthru
      _
    %p1078 = scmp.le.s32.totalorder 2, %s21
    // Predicated region
    $region37: #{tpu_custom_call.1} parent=5 // pred_check
      %p1079 = pneg %p1078
    $region38: #{tpu_custom_call.1} parent=5 // pred_check_branch
      %1081 = sbr.rel (%p1079) target = $region40
    $region39: #{tpu_custom_call.1} parent=5 // pred_region
      %s1082 = ssub.s32 %s21, 2
      // Predicated region
      $region41: #{tpu_custom_call.1} parent=39 // pred_check
        %p1083 = pneg %p130
      $region42: #{tpu_custom_call.1} parent=39 // pred_check_branch
        %1085 = sbr.rel (%p1083) target = $region44
      $region43: #{tpu_custom_call.1} parent=39 // pred_region
        %p1086 = scmp.lt.s32.totalorder %s27, 4
        %s1087 = scalar_select %p1086, %s27, 4
        %s1088 = smul.addr %s1087, 2
        %s1089 = smul.addr %s1088, 8
        %s1090 = scalar_lea.vmem %s5, %s1089
      $region44: #{tpu_custom_call.1} parent=39 // pred_fallthru
        _
    $region40: #{tpu_custom_call.1} parent=5 // pred_fallthru
      _
  $region6: #{tpu_custom_call.1} parent=0 // loop_footer
    %s25 = sadd.s32 1, %s21
  $region7: #{tpu_custom_call.1} parent=0 // loop_footer_branch
    %20 = sbr.rel target = $region3
  $region8: #{tpu_custom_call.1} parent=0 // loop_exit
    _

</llo_original>
